<compile_context>
chip_gen: v7x
topology: tpu7x:2x2x1
jax: 0.10.0
libtpu: 0.0.40
codegen_flags: <defaults>
</compile_context>

<pallas_src>
import jax
import jax.numpy as jnp
from jax.experimental import pallas as pl
from jax.experimental.pallas import tpu as pltpu

F_IN = 100   # input features
H1 = 64
H2 = 16


def _cdiv(a, b):
    return -(-a // b)


def _round_up(x, m):
    return _cdiv(x, m) * m


def _silu(h):
    # sigmoid(h) = 0.5 * (tanh(h/2) + 1): a single EUP transcendental per element.
    return h * (0.5 * (jnp.tanh(0.5 * h) + 1.0))


def _mlp_kernel(x_ref, w1_ref, b1_ref, w2_ref, b2_ref, w3_ref, b3_ref, o_ref):
    # Layer 1: (TB,100) @ (100,64) + (1,64) -> SiLU   (MXU, then VPU/EUP)
    h = jnp.dot(x_ref[...], w1_ref[...], preferred_element_type=jnp.float32)
    h = _silu(h + b1_ref[...])

    # Layer 2: (TB,64) @ (64,16) + (1,16) -> SiLU
    h = jnp.dot(h, w2_ref[...], preferred_element_type=jnp.float32)
    h = _silu(h + b2_ref[...])

    # Layer 3 (16 -> 1) on the VPU + XLU instead of a <1%-utilized MXU pass:
    #   (TB,16) * (1,16) broadcast, lane reduction -> (TB,1).
    col = jnp.sum(h * w3_ref[...], axis=-1, keepdims=True)          # (TB, 1)

    # Lane-dense store: transpose the column to a (1, TB) row (XLU) and add bias.
    row = col.T + b3_ref[...]                                       # (1, TB)
    o_ref[...] = row.reshape(o_ref.shape).astype(o_ref.dtype)


def _choose_tiling(B, tile_batch):
    """Pick (TB, num_tiles) with minimal padding, >=2 even tiles when possible."""
    num_tiles = _cdiv(B, tile_batch)
    if num_tiles == 1 and B >= 16:
        num_tiles = 2                      # let both v7x TensorCores work
    elif num_tiles > 1 and num_tiles % 2 == 1:
        num_tiles += 1                     # even tile count -> balanced megacore split
    TB = _round_up(_cdiv(B, num_tiles), 8)
    num_tiles = _cdiv(B, TB)               # re-derive after rounding TB up
    return TB, num_tiles


def network_v1_forward(x, params, *, tile_batch=2048):
    """x: (B, 100) float32.  params: PyTorch-equivalent weights stored transposed
    (w_k has shape (in, out)) and biases as (1, out)."""
    B, F = x.shape
    assert F == F_IN, F
    w1, b1 = params["w1"], params["b1"]
    w2, b2 = params["w2"], params["b2"]
    w3, b3 = params["w3"], params["b3"]
    w3_row = w3.reshape(1, H2)             # (16,1) -> (1,16) row for the lane reduction

    TB, num_tiles = _choose_tiling(B, tile_batch)
    rows = num_tiles * TB                  # >= B; ragged last tile handled by Pallas

    # Advisory cost estimate so XLA schedules the custom call sensibly.
    cost = pl.CostEstimate(
        flops=2 * rows * (F_IN * H1 + H1 * H2 + H2),
        transcendentals=rows * (H1 + H2),
        bytes_accessed=4 * (rows * (F_IN + 1)
                            + F_IN * H1 + H1 + H1 * H2 + H2 + H2 + 1),
    )

    resident = lambda shape: pl.BlockSpec(shape, lambda i: (0,) * len(shape))

    out = pl.pallas_call(
        _mlp_kernel,
        out_shape=jax.ShapeDtypeStruct((num_tiles, 1, TB), jnp.float32),
        grid=(num_tiles,),
        in_specs=[
            pl.BlockSpec((TB, F_IN), lambda i: (i, 0)),   # x: streamed, unpadded
            resident(w1.shape), resident(b1.shape),
            resident(w2.shape), resident(b2.shape),
            resident(w3_row.shape), resident(b3.shape),
        ],
        out_specs=pl.BlockSpec((1, 1, TB), lambda i: (i, 0, 0)),
        compiler_params=pltpu.CompilerParams(
            dimension_semantics=("parallel",)),
        cost_estimate=cost,
    )(x, w1, b1, w2, b2, w3_row, b3)

    # (num_tiles, 1, TB) flattens back to batch order; drop the ragged tail.
    return out.reshape(rows, 1)[:B]


def init_params(key):
    """Deterministic init mimicking PyTorch nn.Linear (uniform in +-1/sqrt(fan_in))."""
    dims = [(F_IN, H1), (H1, H2), (H2, 1)]
    params = {}
    for i, (fan_in, fan_out) in enumerate(dims, start=1):
        key, kw, kb = jax.random.split(key, 3)
        bound = 1.0 / jnp.sqrt(fan_in)
        params[f"w{i}"] = jax.random.uniform(
            kw, (fan_in, fan_out), jnp.float32, -bound, bound)
        params[f"b{i}"] = jax.random.uniform(
            kb, (1, fan_out), jnp.float32, -bound, bound)
    return params


def _reference(x, p):
    h = x @ p["w1"] + p["b1"]
    h = h * jax.nn.sigmoid(h)
    h = h @ p["w2"] + p["b2"]
    h = h * jax.nn.sigmoid(h)
    return h @ p["w3"] + p["b3"]


if __name__ == "__main__":
    key = jax.random.PRNGKey(0)
    key, kx1, kx2 = jax.random.split(key, 3)
    params = init_params(key)

    # Small shape consistent with the module (single-tile path).
    B = 8
    x = jax.random.normal(kx1, (B, F_IN), jnp.float32)
    out = jax.block_until_ready(network_v1_forward(x, params))
    ref = _reference(x, params)
    assert out.shape == (B, 1), out.shape
    assert jnp.allclose(out, ref, atol=1e-5, rtol=1e-5), (
        f"max abs err {jnp.max(jnp.abs(out - ref))}")

    # Multi-tile path with a ragged last tile (exercises grid + OOB masking).
    B2 = 600
    x2 = jax.random.normal(kx2, (B2, F_IN), jnp.float32)
    out2 = jax.block_until_ready(network_v1_forward(x2, params))
    ref2 = _reference(x2, params)
    assert out2.shape == (B2, 1), out2.shape
    assert jnp.allclose(out2, ref2, atol=1e-5, rtol=1e-5), (
        f"max abs err {jnp.max(jnp.abs(out2 - ref2))}")

    print("KERNEL_OK")
</pallas_src>

<mosaic_0001>
module attributes {stable_mosaic.version = 11 : i64} {
  func.func @_mlp_kernel(%arg0: i32, %arg1: memref<8x100xf32, #tpu.memory_space<vmem>>, %arg2: memref<100x64xf32, #tpu.memory_space<vmem>>, %arg3: memref<1x64xf32, #tpu.memory_space<vmem>>, %arg4: memref<64x16xf32, #tpu.memory_space<vmem>>, %arg5: memref<1x16xf32, #tpu.memory_space<vmem>>, %arg6: memref<1x16xf32, #tpu.memory_space<vmem>>, %arg7: memref<1x1xf32, #tpu.memory_space<vmem>>, %arg8: memref<1x1x8xf32, #tpu.memory_space<vmem>>) attributes {dimension_semantics = [#tpu.dimension_semantics<parallel>], iteration_bounds = array<i64: 1>, scalar_prefetch = 0 : i64, scratch_operands = 0 : i64, tpu.core_type = #tpu.core_type<tc>, window_params = [{transform_indices = @transform_0, window_bounds = array<i64: 8, 100>}, {pipeline_mode = #tpu.pipeline_mode<synchronous>, transform_indices = @transform_1, window_bounds = array<i64: 100, 64>}, {pipeline_mode = #tpu.pipeline_mode<synchronous>, transform_indices = @transform_2, window_bounds = array<i64: 1, 64>}, {pipeline_mode = #tpu.pipeline_mode<synchronous>, transform_indices = @transform_3, window_bounds = array<i64: 64, 16>}, {pipeline_mode = #tpu.pipeline_mode<synchronous>, transform_indices = @transform_4, window_bounds = array<i64: 1, 16>}, {pipeline_mode = #tpu.pipeline_mode<synchronous>, transform_indices = @transform_5, window_bounds = array<i64: 1, 16>}, {pipeline_mode = #tpu.pipeline_mode<synchronous>, transform_indices = @transform_6, window_bounds = array<i64: 1, 1>}, {transform_indices = @transform_7, window_bounds = array<i64: 1, 1, 8>}]} {
    %c0 = arith.constant 0 : index
    %c0_0 = arith.constant 0 : index
    %0 = vector.load %arg1[%c0, %c0_0] : memref<8x100xf32, #tpu.memory_space<vmem>>, vector<8x100xf32>
    %c0_1 = arith.constant 0 : index
    %c0_2 = arith.constant 0 : index
    %1 = vector.load %arg2[%c0_1, %c0_2] : memref<100x64xf32, #tpu.memory_space<vmem>>, vector<100x64xf32>
    %cst = arith.constant dense<0.000000e+00> : vector<8x64xf32>
    %2 = tpu.matmul %0, %1, %cst {dimension_numbers = #tpu.dot_dimension_numbers<[1], [0], [0], [1], [0, 0, 1, 1], [], []>} : vector<8x100xf32>, vector<100x64xf32>, vector<8x64xf32> -> vector<8x64xf32>
    %c0_3 = arith.constant 0 : index
    %c0_4 = arith.constant 0 : index
    %3 = vector.load %arg3[%c0_3, %c0_4] : memref<1x64xf32, #tpu.memory_space<vmem>>, vector<1x64xf32>
    %4 = vector.broadcast %3 : vector<1x64xf32> to vector<8x64xf32>
    %5 = arith.addf %2, %4 : vector<8x64xf32>
    %cst_5 = arith.constant 5.000000e-01 : f32
    %6 = vector.broadcast %cst_5 : f32 to vector<8x64xf32>
    %7 = arith.mulf %6, %5 : vector<8x64xf32>
    %8 = math.tanh %7 : vector<8x64xf32>
    %cst_6 = arith.constant 1.000000e+00 : f32
    %9 = vector.broadcast %cst_6 : f32 to vector<8x64xf32>
    %10 = arith.addf %8, %9 : vector<8x64xf32>
    %cst_7 = arith.constant 5.000000e-01 : f32
    %11 = vector.broadcast %cst_7 : f32 to vector<8x64xf32>
    %12 = arith.mulf %11, %10 : vector<8x64xf32>
    %13 = arith.mulf %5, %12 : vector<8x64xf32>
    %c0_8 = arith.constant 0 : index
    %c0_9 = arith.constant 0 : index
    %14 = vector.load %arg4[%c0_8, %c0_9] : memref<64x16xf32, #tpu.memory_space<vmem>>, vector<64x16xf32>
    %cst_10 = arith.constant dense<0.000000e+00> : vector<8x16xf32>
    %15 = tpu.matmul %13, %14, %cst_10 {dimension_numbers = #tpu.dot_dimension_numbers<[1], [0], [0], [1], [0, 0, 1, 1], [], []>} : vector<8x64xf32>, vector<64x16xf32>, vector<8x16xf32> -> vector<8x16xf32>
    %c0_11 = arith.constant 0 : index
    %c0_12 = arith.constant 0 : index
    %16 = vector.load %arg5[%c0_11, %c0_12] : memref<1x16xf32, #tpu.memory_space<vmem>>, vector<1x16xf32>
    %17 = vector.broadcast %16 : vector<1x16xf32> to vector<8x16xf32>
    %18 = arith.addf %15, %17 : vector<8x16xf32>
    %cst_13 = arith.constant 5.000000e-01 : f32
    %19 = vector.broadcast %cst_13 : f32 to vector<8x16xf32>
    %20 = arith.mulf %19, %18 : vector<8x16xf32>
    %21 = math.tanh %20 : vector<8x16xf32>
    %cst_14 = arith.constant 1.000000e+00 : f32
    %22 = vector.broadcast %cst_14 : f32 to vector<8x16xf32>
    %23 = arith.addf %21, %22 : vector<8x16xf32>
    %cst_15 = arith.constant 5.000000e-01 : f32
    %24 = vector.broadcast %cst_15 : f32 to vector<8x16xf32>
    %25 = arith.mulf %24, %23 : vector<8x16xf32>
    %26 = arith.mulf %18, %25 : vector<8x16xf32>
    %c0_16 = arith.constant 0 : index
    %c0_17 = arith.constant 0 : index
    %27 = vector.load %arg6[%c0_16, %c0_17] : memref<1x16xf32, #tpu.memory_space<vmem>>, vector<1x16xf32>
    %28 = vector.broadcast %27 : vector<1x16xf32> to vector<8x16xf32>
    %29 = arith.mulf %26, %28 : vector<8x16xf32>
    %cst_18 = arith.constant dense<0.000000e+00> : vector<8xf32>
    %30 = vector.multi_reduction <add>, %29, %cst_18 [1] : vector<8x16xf32> to vector<8xf32>
    %31 = vector.shape_cast %30 : vector<8xf32> to vector<8x1xf32>
    %32 = tpu.transpose %31, [1, 0] : vector<8x1xf32> -> vector<1x8xf32>
    %c0_19 = arith.constant 0 : index
    %c0_20 = arith.constant 0 : index
    %33 = vector.load %arg7[%c0_19, %c0_20] : memref<1x1xf32, #tpu.memory_space<vmem>>, vector<1x1xf32>
    %34 = vector.broadcast %33 : vector<1x1xf32> to vector<1x8xf32>
    %35 = arith.addf %32, %34 : vector<1x8xf32>
    %36 = vector.shape_cast %35 : vector<1x8xf32> to vector<1x1x8xf32>
    %c0_21 = arith.constant 0 : index
    %c0_22 = arith.constant 0 : index
    %c0_23 = arith.constant 0 : index
    %37 = vector.load %arg8[%c0_21, %c0_22, %c0_23] : memref<1x1x8xf32, #tpu.memory_space<vmem>>, vector<1x1x8xf32>
    tpu.vector_store %arg8[%c0_21, %c0_22, %c0_23], %36 {strides = array<i32>} : memref<1x1x8xf32, #tpu.memory_space<vmem>>, vector<1x1x8xf32>,
    return
  }
  func.func @transform_0(%arg0: i32) -> (i32, i32) {
    %c0_i32 = arith.constant 0 : i32
    %c0_i32_0 = arith.constant 0 : i32
    return %arg0, %c0_i32 : i32, i32
  }
  func.func @transform_1(%arg0: i32) -> (i32, i32) {
    %c0_i32 = arith.constant 0 : i32
    %c0_i32_0 = arith.constant 0 : i32
    %c0_i32_1 = arith.constant 0 : i32
    return %c0_i32, %c0_i32_0 : i32, i32
  }
  func.func @transform_2(%arg0: i32) -> (i32, i32) {
    %c0_i32 = arith.constant 0 : i32
    %c0_i32_0 = arith.constant 0 : i32
    %c0_i32_1 = arith.constant 0 : i32
    return %c0_i32, %c0_i32_0 : i32, i32
  }
  func.func @transform_3(%arg0: i32) -> (i32, i32) {
    %c0_i32 = arith.constant 0 : i32
    %c0_i32_0 = arith.constant 0 : i32
    %c0_i32_1 = arith.constant 0 : i32
    return %c0_i32, %c0_i32_0 : i32, i32
  }
  func.func @transform_4(%arg0: i32) -> (i32, i32) {
    %c0_i32 = arith.constant 0 : i32
    %c0_i32_0 = arith.constant 0 : i32
    %c0_i32_1 = arith.constant 0 : i32
    return %c0_i32, %c0_i32_0 : i32, i32
  }
  func.func @transform_5(%arg0: i32) -> (i32, i32) {
    %c0_i32 = arith.constant 0 : i32
    %c0_i32_0 = arith.constant 0 : i32
    %c0_i32_1 = arith.constant 0 : i32
    return %c0_i32, %c0_i32_0 : i32, i32
  }
  func.func @transform_6(%arg0: i32) -> (i32, i32) {
    %c0_i32 = arith.constant 0 : i32
    %c0_i32_0 = arith.constant 0 : i32
    %c0_i32_1 = arith.constant 0 : i32
    return %c0_i32, %c0_i32_0 : i32, i32
  }
  func.func @transform_7(%arg0: i32) -> (i32, i32, i32) {
    %c0_i32 = arith.constant 0 : i32
    %c0_i32_0 = arith.constant 0 : i32
    %c0_i32_1 = arith.constant 0 : i32
    return %arg0, %c0_i32, %c0_i32_0 : i32, i32, i32
  }
}

</mosaic_0001>

<llo_original>
// kernel: tpu_custom_call.1
$region0: #{tpu_custom_call.1}
  #allocation0 [shape = 'u32[]', space=smem, size = 0x4, offset = 0x4, fixed_abs, tag = 'smem constant byte address 0x4 - core index']
  #allocation1 [shape = 'u32[144,128]{1,0:T(1,128)}', space=vmem, size = 0x12000, scoped, tag = 'internal scratch']
  #allocation2 [shape = 'f32[1,1]{1,0:T(1,128)S(1)}', space=vmem, size = 0x200, scoped, tag = 'scoped memory for tpu_custom_call.1']
  %s0 = inlined_call_operand.vmem [shape: f32[8,100], index: 0, kind: input, shape index: {}]
  %s1 = inlined_call_operand.vmem [shape: f32[100,64], index: 1, kind: input, shape index: {}]
  %s2 = inlined_call_operand.vmem [shape: f32[1,64], index: 2, kind: input, shape index: {}]
  %s3 = inlined_call_operand.vmem [shape: f32[64,16], index: 3, kind: input, shape index: {}]
  %s4 = inlined_call_operand.vmem [shape: f32[1,16], index: 4, kind: input, shape index: {}]
  %s5 = inlined_call_operand.vmem [shape: f32[1,16], index: 5, kind: input, shape index: {}]
  %s6 = inlined_call_operand.<no memory space> [shape: f32[1,1], index: 6, kind: input, shape index: {}]
  %s7 = inlined_call_operand.hbm [shape: f32[1,1,8], index: 7, kind: output, shape index: {}]
  %s8 = sld [smem:[#allocation0]]
  $region38: #{tpu_custom_call.1} parent=0
    _
  %s10 = ssub.s32 1, %s8
  %s11 = scalar_select 0, %s10, %s8
  %v12 = vstv %s6
  %13 = vst [vmem:[#allocation2] sm:$0x1] %v12
  $region1: #{tpu_custom_call.1} parent=0
    #allocation3 [shape = 'u8[512]{0}', space=vmem, size = 0x400, scoped, tag = 'output window, operand 0, single buffered']
    #allocation4 [shape = 's32[1]{0}', space=sflag, size = 0x4, scoped, tag = 'scoped memory for tpu_custom_call.1']
    %14 = vsyncpa [#allocation4], 0
    // Predicated region
    $region2: #{tpu_custom_call.1} parent=1 // pred_check
      _
    $region3: #{tpu_custom_call.1} parent=1 // pred_check_branch
      %16 = sbr.rel (0) target = $region5
    $region4: #{tpu_custom_call.1} parent=1 // pred_region
      _
    $region5: #{tpu_custom_call.1} parent=1 // pred_fallthru
      _
    // Predicated region
    $region6: #{tpu_custom_call.1} parent=1 // pred_check
      _
    $region7: #{tpu_custom_call.1} parent=1 // pred_check_branch
      %18 = sbr.rel (0) target = $region9
    $region8: #{tpu_custom_call.1} parent=1 // pred_region
      _
    $region9: #{tpu_custom_call.1} parent=1 // pred_fallthru
      _
    // Predicated region
    $region10: #{tpu_custom_call.1} parent=1 // pred_check
      _
    $region11: #{tpu_custom_call.1} parent=1 // pred_check_branch
      %20 = sbr.rel (0) target = $region13
    $region12: #{tpu_custom_call.1} parent=1 // pred_region
      _
    $region13: #{tpu_custom_call.1} parent=1 // pred_fallthru
      _
    // Predicated region
    $region14: #{tpu_custom_call.1} parent=1 // pred_check
      _
    $region15: #{tpu_custom_call.1} parent=1 // pred_check_branch
      %22 = sbr.rel (0) target = $region17
    $region16: #{tpu_custom_call.1} parent=1 // pred_region
      _
    $region17: #{tpu_custom_call.1} parent=1 // pred_fallthru
      _
    // Predicated region
    $region18: #{tpu_custom_call.1} parent=1 // pred_check
      _
    $region19: #{tpu_custom_call.1} parent=1 // pred_check_branch
      %24 = sbr.rel (0) target = $region21
    $region20: #{tpu_custom_call.1} parent=1 // pred_region
      _
    $region21: #{tpu_custom_call.1} parent=1 // pred_fallthru
      _
    // Predicated region
    $region22: #{tpu_custom_call.1} parent=1 // pred_check
      _
    $region23: #{tpu_custom_call.1} parent=1 // pred_check_branch
      %26 = sbr.rel (0) target = $region25
    $region24: #{tpu_custom_call.1} parent=1 // pred_region
      _
    $region25: #{tpu_custom_call.1} parent=1 // pred_fallthru
      _
    // Predicated region
    $region26: #{tpu_custom_call.1} parent=1 // pred_check
      _
    $region27: #{tpu_custom_call.1} parent=1 // pred_check_branch
      %28 = sbr.rel (0) target = $region29
    $region28: #{tpu_custom_call.1} parent=1 // pred_region
      _
    $region29: #{tpu_custom_call.1} parent=1 // pred_fallthru
      _
    %v29 = vld [vmem:[%s0] sm:$0xff]
    %v30 = vld [vmem:[%s1] sm:$0xff]
    %v31 = vld [vmem:[%s1 + $0x8] sm:$0xff]
    %v32 = vld [vmem:[%s1 + $0x10] sm:$0xff]
    %v33 = vld [vmem:[%s1 + $0x18] sm:$0xff]
    %v34 = vld [vmem:[%s1 + $0x20] sm:$0xff]
    %v35 = vld [vmem:[%s1 + $0x28] sm:$0xff]
    %v36 = vld [vmem:[%s1 + $0x30] sm:$0xff]
    %v37 = vld [vmem:[%s1 + $0x38] sm:$0xff]
    %v38 = vld [vmem:[%s1 + $0x40] sm:$0xff]
    %v39 = vld [vmem:[%s1 + $0x48] sm:$0xff]
    %v40 = vld [vmem:[%s1 + $0x50] sm:$0xff]
    %v41 = vld [vmem:[%s1 + $0x58] sm:$0xff]
    %v42 = vld [vmem:[%s1 + $0x60] sm:$0xf]
    %v43 = vld [vmem:[%s2] sm:$0x1]
    %v45 = vlaneseq
    %v46 = vshrl.u32 %v45, 7
    %v47 = vsub.s32 0, %v46
    %v48 = vrot.slane %v43, %v47
    %vm50 = vcmask 818176
    %v52 = vsel %vm50, %v29, 0
    %vm54 = vcmask 1043456
    %v56 = vsel %vm54, %v42, 0
    %58 = vmatprep.subr.mxu0 0.0
    %59 = vmatpush1.msra.mxu0 %v30
    %60 = vmatprep.subr.mxu0 0.0
    %61 = vmatpush1.msra.mxu0 %v31
    %62 = vmatprep.subr.mxu0 0.0
    %63 = vmatpush1.msra.mxu0 %v32
    %64 = vmatprep.subr.mxu0 0.0
    %65 = vmatpush1.msra.mxu0 %v33
    %66 = vmatprep.subr.mxu0 0.0
    %67 = vmatpush1.msra.mxu0 %v34
    %68 = vmatprep.subr.mxu0 0.0
    %69 = vmatpush1.msra.mxu0 %v35
    %70 = vmatprep.subr.mxu0 0.0
    %71 = vmatpush1.msra.mxu0 %v36
    %72 = vmatprep.subr.mxu0 0.0
    %73 = vmatpush1.msra.mxu0 %v37
    %74 = vmatprep.subr.mxu0 0.0
    %75 = vmatpush1.msra.mxu0 %v38
    %76 = vmatprep.subr.mxu0 0.0
    %77 = vmatpush1.msra.mxu0 %v39
    %78 = vmatprep.subr.mxu0 0.0
    %79 = vmatpush1.msra.mxu0 %v40
    %80 = vmatprep.subr.mxu0 0.0
    %81 = vmatpush1.msra.mxu0 %v41
    %82 = vmatprep.subr.mxu0 0.0
    %83 = vmatpush1.msra.mxu0 %v56
    %84 = vmatprep.subr.mxu0 0.0
    %85 = vmatpush1.msra.mxu0 0.0
    %86 = vmatprep.subr.mxu0 0.0
    %87 = vmatpush1.msra.mxu0 0.0
    %88 = vmatprep.subr.mxu0 0.0
    %89 = vmatpush1.msra.mxu0 0.0
    %90 = vmatprep.subr.mxu0 0.0
    %91 = vmatpush1.msra.mxu0 0.0
    %92 = vmatprep.subr.mxu0 0.0
    %93 = vmatpush1.msra.mxu0 0.0
    %94 = vmatprep.subr.mxu0 0.0
    %95 = vmatpush1.msra.mxu0 0.0
    %96 = vmatprep.subr.mxu0 0.0
    %97 = vmatpush1.msra.mxu0 0.0
    %98 = vmatprep.subr.mxu0 0.0
    %99 = vmatpush1.msra.mxu0 0.0
    %100 = vmatprep.subr.mxu0 0.0
    %101 = vmatpush1.msra.mxu0 0.0
    %102 = vmatprep.subr.mxu0 0.0
    %103 = vmatpush1.msra.mxu0 0.0
    %104 = vmatprep.subr.mxu0 0.0
    %105 = vmatpush1.msra.mxu0 0.0
    %106 = vmatprep.subr.mxu0 0.0
    %107 = vmatpush1.msra.mxu0 0.0
    %108 = vmatprep.subr.mxu0 0.0
    %109 = vmatpush1.msra.mxu0 0.0
    %110 = vmatprep.subr.mxu0 0.0
    %111 = vmatpush1.msra.mxu0 0.0
    %112 = vmatprep.subr.mxu0 0.0
    %113 = vmatpush1.msra.mxu0 0.0
    %114 = vmatprep.subr.mxu0 0.0
    %115 = vmatpush1.msra.mxu0 0.0
    %116 = vmatprep.subr.mxu0 0.0
    %117 = vmatpush1.msra.mxu0 0.0
    %118 = vmatprep.subr.mxu0 0.0
    %119 = vmatpush1.msra.mxu0 0.0
    %120 = vmatprep.subr.mxu0 0.0
    %121 = vmatpush1.msra.mxu0 0.0
    %122 = vmatprep.mubr.f32.mxu0 0.0
    %123 = vmatmul.mubr.f32.gmra.mrb[0].mxu0 %v52
    %v124 = vpop.f32.mrb[0].mxu0
    %v125 = vadd.f32 %v48, %v124
    %v126 = vpop.f32.mrb[0].mxu0
    %127 = vdwg.mxu0
    %v128 = vmul.f32 %v125, 0.5
    %v129 = vtanh.pop %v128
    %v130 = vadd.f32 %v129, 1.0
    %v131 = vmul.f32 %v130, 0.5
    %v132 = vmul.f32 %v125, %v131
    %v133 = vld [vmem:[%s3] sm:$0xff]
    %v134 = vld [vmem:[%s3 + $0x8] sm:$0xff]
    %v135 = vld [vmem:[%s3 + $0x10] sm:$0xff]
    %v136 = vld [vmem:[%s3 + $0x18] sm:$0xff]
    %v137 = vld [vmem:[%s3 + $0x20] sm:$0xff]
    %v138 = vld [vmem:[%s3 + $0x28] sm:$0xff]
    %v139 = vld [vmem:[%s3 + $0x30] sm:$0xff]
    %v140 = vld [vmem:[%s3 + $0x38] sm:$0xff]
    %v141 = vld [vmem:[%s4] sm:$0x1]
    %v143 = vlaneseq
    %v144 = vshrl.u32 %v143, 7
    %v145 = vsub.s32 0, %v144
    %v146 = vrot.slane %v141, %v145
    %vm148 = vcmask 523264
    %v150 = vsel %vm148, %v132, 0
    %152 = vmatprep.subr.mxu0 0.0
    %153 = vmatpush1.msra.mxu0 %v133
    %154 = vmatprep.subr.mxu0 0.0
    %155 = vmatpush1.msra.mxu0 %v134
    %156 = vmatprep.subr.mxu0 0.0
    %157 = vmatpush1.msra.mxu0 %v135
    %158 = vmatprep.subr.mxu0 0.0
    %159 = vmatpush1.msra.mxu0 %v136
    %160 = vmatprep.subr.mxu0 0.0
    %161 = vmatpush1.msra.mxu0 %v137
    %162 = vmatprep.subr.mxu0 0.0
    %163 = vmatpush1.msra.mxu0 %v138
    %164 = vmatprep.subr.mxu0 0.0
    %165 = vmatpush1.msra.mxu0 %v139
    %166 = vmatprep.subr.mxu0 0.0
    %167 = vmatpush1.msra.mxu0 %v140
    %168 = vmatprep.subr.mxu0 0.0
    %169 = vmatpush1.msra.mxu0 0.0
    %170 = vmatprep.subr.mxu0 0.0
    %171 = vmatpush1.msra.mxu0 0.0
    %172 = vmatprep.subr.mxu0 0.0
    %173 = vmatpush1.msra.mxu0 0.0
    %174 = vmatprep.subr.mxu0 0.0
    %175 = vmatpush1.msra.mxu0 0.0
    %176 = vmatprep.subr.mxu0 0.0
    %177 = vmatpush1.msra.mxu0 0.0
    %178 = vmatprep.subr.mxu0 0.0
    %179 = vmatpush1.msra.mxu0 0.0
    %180 = vmatprep.subr.mxu0 0.0
    %181 = vmatpush1.msra.mxu0 0.0
    %182 = vmatprep.subr.mxu0 0.0
    %183 = vmatpush1.msra.mxu0 0.0
    %184 = vmatprep.subr.mxu0 0.0
    %185 = vmatpush1.msra.mxu0 0.0
    %186 = vmatprep.subr.mxu0 0.0
    %187 = vmatpush1.msra.mxu0 0.0
    %188 = vmatprep.subr.mxu0 0.0
    %189 = vmatpush1.msra.mxu0 0.0
    %190 = vmatprep.subr.mxu0 0.0
    %191 = vmatpush1.msra.mxu0 0.0
    %192 = vmatprep.subr.mxu0 0.0
    %193 = vmatpush1.msra.mxu0 0.0
    %194 = vmatprep.subr.mxu0 0.0
    %195 = vmatpush1.msra.mxu0 0.0
    %196 = vmatprep.subr.mxu0 0.0
    %197 = vmatpush1.msra.mxu0 0.0
    %198 = vmatprep.subr.mxu0 0.0
    %199 = vmatpush1.msra.mxu0 0.0
    %200 = vmatprep.subr.mxu0 0.0
    %201 = vmatpush1.msra.mxu0 0.0
    %202 = vmatprep.subr.mxu0 0.0
    %203 = vmatpush1.msra.mxu0 0.0
    %204 = vmatprep.subr.mxu0 0.0
    %205 = vmatpush1.msra.mxu0 0.0
    %206 = vmatprep.subr.mxu0 0.0
    %207 = vmatpush1.msra.mxu0 0.0
    %208 = vmatprep.subr.mxu0 0.0
    %209 = vmatpush1.msra.mxu0 0.0
    %210 = vmatprep.subr.mxu0 0.0
    %211 = vmatpush1.msra.mxu0 0.0
    %212 = vmatprep.subr.mxu0 0.0
    %213 = vmatpush1.msra.mxu0 0.0
    %214 = vmatprep.subr.mxu0 0.0
    %215 = vmatpush1.msra.mxu0 0.0
    %216 = vmatprep.mubr.f32.mxu0 0.0
    %217 = vmatmul.mubr.f32.gmra.mrb[0].mxu0 %v150
    %v218 = vpop.f32.mrb[0].mxu0
    %v219 = vadd.f32 %v146, %v218
    %v220 = vpop.f32.mrb[0].mxu0
    %221 = vdwg.mxu0
    %v222 = vmul.f32 %v219, 0.5
    %v223 = vtanh.pop %v222
    %v224 = vadd.f32 %v223, 1.0
    %v225 = vmul.f32 %v224, 0.5
    %v226 = vmul.f32 %v219, %v225
    %v227 = vld [vmem:[%s5] sm:$0x1]
    %v229 = vlaneseq
    %v230 = vshrl.u32 %v229, 7
    %v231 = vsub.s32 0, %v230
    %v232 = vrot.slane %v227, %v231
    %v234 = vmul.f32 %v226, %v232
    %vm235 = vcmask 130048
    %v236 = vsel %vm235, %v234, 0.0
    %237 = vadd.xlane.f32.xlu0 %v236
    %v238 = vpop.xlane.xlu0 %237
    %239 = vxpose.xlu0.b32.start [1/16] %v238, 128
    %240 = vxpose.xlu0.b32.cont [2/16] 0.0, 128
    %241 = vxpose.xlu0.b32.cont [3/16] 0.0, 128
    %242 = vxpose.xlu0.b32.cont [4/16] 0.0, 128
    %243 = vxpose.xlu0.b32.cont [5/16] 0.0, 128
    %244 = vxpose.xlu0.b32.cont [6/16] 0.0, 128
    %245 = vxpose.xlu0.b32.cont [7/16] 0.0, 128
    %246 = vxpose.xlu0.b32.cont [8/16] 0.0, 128
    %247 = vxpose.xlu0.b32.cont [9/16] 0.0, 128
    %248 = vxpose.xlu0.b32.cont [10/16] 0.0, 128
    %249 = vxpose.xlu0.b32.cont [11/16] 0.0, 128
    %250 = vxpose.xlu0.b32.cont [12/16] 0.0, 128
    %251 = vxpose.xlu0.b32.cont [13/16] 0.0, 128
    %252 = vxpose.xlu0.b32.cont [14/16] 0.0, 128
    %253 = vxpose.xlu0.b32.cont [15/16] 0.0, 128
    %254 = vxpose.xlu0.b32.end [16/16] 0.0, 128
    %v255 = vpop.trf.xlu0
    %v256 = vpop.trf.xlu0
    %v257 = vpop.trf.xlu0
    %v258 = vpop.trf.xlu0
    %v259 = vpop.trf.xlu0
    %v260 = vpop.trf.xlu0
    %v261 = vpop.trf.xlu0
    %v262 = vpop.trf.xlu0
    %v263 = vpop.trf.xlu0
    %v264 = vpop.trf.xlu0
    %v265 = vpop.trf.xlu0
    %v266 = vpop.trf.xlu0
    %v267 = vpop.trf.xlu0
    %v268 = vpop.trf.xlu0
    %v269 = vpop.trf.xlu0
    %v270 = vpop.trf.xlu0
    %v271 = vld [vmem:[#allocation2] sm:$0x1]
    %273 = vset.pattern.permute.xlu0 0
    %274 = vperm.xlu0 %273, %v271
    %v275 = vpop.permute.xlu0 %274
    %v277 = vlaneseq
    %v278 = vshrl.u32 %v277, 7
    %v279 = vsub.s32 0, %v278
    %v280 = vrot.slane %v275, %v279
    %v281 = vadd.f32 %v255, %v280
    %vm282 = vcmask 57344
    %283 = vst.msk [vmem:[#allocation3] sm:$0x1] %vm282, %v281
    // Predicated region
    $region30: #{tpu_custom_call.1} parent=1 // pred_check
      _
    $region31: #{tpu_custom_call.1} parent=1 // pred_check_branch
      %285 = sbr.rel (0) target = $region33
    $region32: #{tpu_custom_call.1} parent=1 // pred_region
      %s287 = ssub.s32 16, 16
      %288 = vsyncadd [#allocation4], %s287
      %s290 = sshll.u32 [#allocation3], 4
      %s291 = int_to_ptr.vmem [resolvable:$true] %s290
      %293 = dma.vmem_to_hbm [thread:$0]  %s291, 16, %s7, [#allocation4]
    $region33: #{tpu_custom_call.1} parent=1 // pred_fallthru
      _
    // Predicated region
    $region34: #{tpu_custom_call.1} parent=1 // pred_check
      _
    $region35: #{tpu_custom_call.1} parent=1 // pred_check_branch
      %295 = sbr.rel (0) target = $region37
    $region36: #{tpu_custom_call.1} parent=1 // pred_region
      %296 = dma.done [#allocation4], 16
    $region37: #{tpu_custom_call.1} parent=1 // pred_fallthru
      _
    %297 = vsyncpa [#allocation4], 1

</llo_original>
